<compile_context>
chip_gen: v7x
topology: tpu7x:2x2x1
jax: 0.10.0
libtpu: 0.0.40
codegen_flags: <defaults>
</compile_context>

<pallas_src>
import math

import jax
import jax.numpy as jnp
from jax.experimental import pallas as pl
from jax.experimental.pallas import tpu as pltpu

_LANES = 128
_SUBLANES = 8


def _normalize_kernel(x_ref, inv_ref, bias_ref, o_ref):
    """out = cast_f32(x) * inv + bias  (one FMA per element).

    x_ref   : (tile_rows, 128) block in the caller's native dtype.
    inv/bias: (const_rows, 128) minimal, period-aligned, VMEM-resident tiles.
    """
    const_rows, lanes = inv_ref.shape
    tile_rows = x_ref.shape[0]
    reps = tile_rows // const_rows
    if reps == 1:
        o_ref[...] = x_ref[...].astype(jnp.float32) * inv_ref[...] + bias_ref[...]
    else:
        # const_rows is a multiple of 8, so this split is (8,128)-tile aligned
        # (free relayout); the small constant tile broadcasts over `reps`.
        x = x_ref[...].astype(jnp.float32).reshape(reps, const_rows, lanes)
        y = x * inv_ref[...] + bias_ref[...]
        o_ref[...] = y.reshape(tile_rows, lanes)


def _round_up(x, m):
    return ((x + m - 1) // m) * m


def _round_down(x, m):
    return (x // m) * m


def normalize_forward(x_nhwc, mean, std):
    """Pallas forward of `Normalize`: (x/255 - mean)/std flattened per batch.

    x_nhwc: (N, H, W, C) any real dtype; mean/std: (C,) -> (N, H*W*C) float32.
    """
    n = x_nhwc.shape[0]
    c = x_nhwc.shape[-1]
    flat = math.prod(x_nhwc.shape[1:])
    total = n * flat

    itemsize = x_nhwc.dtype.itemsize

    # Fold the three elementwise ops into one multiply-add.
    std_f = std.astype(jnp.float32)
    inv = 1.0 / (255.0 * std_f)
    bias = -mean.astype(jnp.float32) / std_f

    # Channel of global flattened element g is g % C, so per-channel constants
    # are periodic with period lcm(C, 128) elements == period_rows rows.
    period_rows = math.lcm(c, _LANES) // _LANES
    const_rows = math.lcm(_SUBLANES, period_rows)          # f32 constant tile rows
    sub_gran = {4: 8, 2: 16, 1: 32}.get(itemsize, 8)       # input sublane packing
    row_gran = math.lcm(const_rows, sub_gran)               # tile_rows granularity

    # Lane-dense 2D view (row-major flatten == torch.flatten(start_dim=1) on NHWC).
    # Input keeps its native dtype; the f32 cast happens in-kernel.
    x_flat = x_nhwc.reshape(total)
    rows = -(-total // _LANES)
    padded_total = rows * _LANES
    if padded_total != total:
        # Only when total % 128 != 0 (rare); pad is < 128 elements.
        x_flat = jnp.pad(x_flat, (0, padded_total - total))
    x2d = x_flat.reshape(rows, _LANES)

    # Block sizing: ~4 MiB f32 blocks, aligned to row_gran; ensure >= 2 grid
    # steps whenever possible so the grid can split across two TensorCores.
    target_rows = (4 << 20) // (_LANES * 4)
    tile_rows = min(_round_up(rows, row_gran),
                    _round_down(max(target_rows, row_gran), row_gran))
    tile_rows = max(tile_rows, row_gran)
    if rows > row_gran:
        half = _round_up(-(-rows // 2), row_gran)
        tile_rows = min(tile_rows, max(row_gran, half))
    num_blocks = pl.cdiv(rows, tile_rows)

    # Minimal period-aligned constant tiles (e.g. 24x128 = 12 KiB for C=3),
    # resident in VMEM across all grid steps.
    ch = jnp.arange(const_rows * _LANES, dtype=jnp.int32) % c
    inv_tile = inv[ch].reshape(const_rows, _LANES)
    bias_tile = bias[ch].reshape(const_rows, _LANES)

    grid_spec = pltpu.PrefetchScalarGridSpec(
        num_scalar_prefetch=0,
        grid=(num_blocks,),
        in_specs=[
            pl.BlockSpec((tile_rows, _LANES), lambda i: (i, 0)),    # data block
            pl.BlockSpec((const_rows, _LANES), lambda i: (0, 0)),   # inv  (resident)
            pl.BlockSpec((const_rows, _LANES), lambda i: (0, 0)),   # bias (resident)
        ],
        out_specs=pl.BlockSpec((tile_rows, _LANES), lambda i: (i, 0)),
    )

    out2d = pl.pallas_call(
        _normalize_kernel,
        out_shape=jax.ShapeDtypeStruct((rows, _LANES), jnp.float32),
        grid_spec=grid_spec,
        compiler_params=pltpu.CompilerParams(
            dimension_semantics=("parallel",),
            vmem_limit_bytes=48 * 1024 * 1024,
        ),
        cost_estimate=pl.CostEstimate(
            flops=2 * total,
            transcendentals=0,
            bytes_accessed=total * itemsize + total * 4
            + 2 * const_rows * _LANES * 4,
        ),
    )(x2d, inv_tile, bias_tile)

    out_flat = out2d.reshape(padded_total)
    if padded_total != total:
        out_flat = out_flat[:total]
    return out_flat.reshape(n, flat)


def _reference(x, mean, std):
    n = x.shape[0]
    xf = x.astype(jnp.float32)
    ref = (xf / 255.0 - mean) / std
    return ref.reshape(n, -1)


if __name__ == "__main__":
    key = jax.random.PRNGKey(0)
    k1, k2, k3, k4 = jax.random.split(key, 4)

    # ImageNet-style per-channel normalization parameters.
    mean = jnp.array([0.485, 0.456, 0.406], dtype=jnp.float32)
    std = jnp.array([0.229, 0.224, 0.225], dtype=jnp.float32)

    def check(x):
        n = x.shape[0]
        flat = math.prod(x.shape[1:])
        out = jax.block_until_ready(normalize_forward(x, mean, std))
        ref = _reference(x, mean, std)
        assert out.shape == (n, flat)
        assert jnp.allclose(out, ref, atol=1e-5, rtol=1e-5)

    # Small f32 shape: single partial block, no wrapper-side pad/slice.
    check(jax.random.normal(k1, (2, 16, 16, 3), dtype=jnp.float32))

    # Shape from the original module (1, 32, 32, 3): exact single block.
    check(jax.random.normal(k2, (1, 32, 32, 3), dtype=jnp.float32))

    # Larger f32 shape: multi-block grid + in-kernel constant broadcast path.
    check(jax.random.normal(k3, (4, 64, 64, 3), dtype=jnp.float32))

    # uint8 input: native-dtype blocks, cast to f32 inside the kernel.
    x_u8 = jax.random.randint(k4, (2, 64, 64, 3), 0, 256, dtype=jnp.int32).astype(jnp.uint8)
    check(x_u8)

    print("KERNEL_OK")
</pallas_src>

<mosaic_0001>
module attributes {stable_mosaic.version = 11 : i64} {
  func.func @_normalize_kernel(%arg0: i32, %arg1: memref<24x128xf32, #tpu.memory_space<vmem>>, %arg2: memref<24x128xf32, #tpu.memory_space<vmem>>, %arg3: memref<24x128xf32, #tpu.memory_space<vmem>>, %arg4: memref<24x128xf32, #tpu.memory_space<vmem>>) attributes {dimension_semantics = [#tpu.dimension_semantics<parallel>], iteration_bounds = array<i64: 1>, scalar_prefetch = 0 : i64, scratch_operands = 0 : i64, tpu.core_type = #tpu.core_type<tc>, window_params = [{transform_indices = @transform_0, window_bounds = array<i64: 24, 128>}, {pipeline_mode = #tpu.pipeline_mode<synchronous>, transform_indices = @transform_1, window_bounds = array<i64: 24, 128>}, {pipeline_mode = #tpu.pipeline_mode<synchronous>, transform_indices = @transform_2, window_bounds = array<i64: 24, 128>}, {transform_indices = @transform_3, window_bounds = array<i64: 24, 128>}]} {
    %c0 = arith.constant 0 : index
    %c0_0 = arith.constant 0 : index
    %0 = vector.load %arg1[%c0, %c0_0] : memref<24x128xf32, #tpu.memory_space<vmem>>, vector<24x128xf32>
    %c0_1 = arith.constant 0 : index
    %c0_2 = arith.constant 0 : index
    %1 = vector.load %arg2[%c0_1, %c0_2] : memref<24x128xf32, #tpu.memory_space<vmem>>, vector<24x128xf32>
    %2 = arith.mulf %0, %1 : vector<24x128xf32>
    %c0_3 = arith.constant 0 : index
    %c0_4 = arith.constant 0 : index
    %3 = vector.load %arg3[%c0_3, %c0_4] : memref<24x128xf32, #tpu.memory_space<vmem>>, vector<24x128xf32>
    %4 = arith.addf %2, %3 : vector<24x128xf32>
    %c0_5 = arith.constant 0 : index
    %c0_6 = arith.constant 0 : index
    %5 = vector.load %arg4[%c0_5, %c0_6] : memref<24x128xf32, #tpu.memory_space<vmem>>, vector<24x128xf32>
    tpu.vector_store %arg4[%c0_5, %c0_6], %4 {strides = array<i32>} : memref<24x128xf32, #tpu.memory_space<vmem>>, vector<24x128xf32>,
    return
  }
  func.func @transform_0(%arg0: i32) -> (i32, i32) {
    %c0_i32 = arith.constant 0 : i32
    %c0_i32_0 = arith.constant 0 : i32
    return %arg0, %c0_i32 : i32, i32
  }
  func.func @transform_1(%arg0: i32) -> (i32, i32) {
    %c0_i32 = arith.constant 0 : i32
    %c0_i32_0 = arith.constant 0 : i32
    %c0_i32_1 = arith.constant 0 : i32
    return %c0_i32, %c0_i32_0 : i32, i32
  }
  func.func @transform_2(%arg0: i32) -> (i32, i32) {
    %c0_i32 = arith.constant 0 : i32
    %c0_i32_0 = arith.constant 0 : i32
    %c0_i32_1 = arith.constant 0 : i32
    return %c0_i32, %c0_i32_0 : i32, i32
  }
  func.func @transform_3(%arg0: i32) -> (i32, i32) {
    %c0_i32 = arith.constant 0 : i32
    %c0_i32_0 = arith.constant 0 : i32
    return %arg0, %c0_i32 : i32, i32
  }
}

</mosaic_0001>

<llo_original>
// kernel: tpu_custom_call.1
$region0: #{tpu_custom_call.1}
  #allocation0 [shape = 'u32[]', space=smem, size = 0x4, offset = 0x4, fixed_abs, tag = 'smem constant byte address 0x4 - core index']
  #allocation1 [shape = 'u32[144,128]{1,0:T(1,128)}', space=vmem, size = 0x12000, scoped, tag = 'internal scratch']
  %s0 = inlined_call_operand.hbm [shape: f32[12,128], index: 0, kind: input, shape index: {}]
  %s1 = inlined_call_operand.hbm [shape: f32[24,128], index: 1, kind: input, shape index: {}]
  %s2 = inlined_call_operand.hbm [shape: f32[24,128], index: 2, kind: input, shape index: {}]
  %s3 = inlined_call_operand.hbm [shape: f32[12,128], index: 3, kind: output, shape index: {}]
  %s4 = sld [smem:[#allocation0]]
  $region34: #{tpu_custom_call.1} parent=0
    _
  %s6 = ssub.s32 1, %s4
  %s7 = scalar_select 0, %s6, %s4
  $region1: #{tpu_custom_call.1} parent=0
    #allocation2 [shape = 'u8[12288]{0}', space=vmem, size = 0x3000, scoped, tag = 'input window, operand 0, single buffered']
    #allocation3 [shape = 's32[1]{0}', space=sflag, size = 0x4, scoped, tag = 'scoped memory for tpu_custom_call.1']
    #allocation4 [shape = 's32[1]{0}', space=sflag, size = 0x4, scoped, tag = 'scoped memory for tpu_custom_call.1']
    #allocation5 [shape = 'u8[12288]{0}', space=vmem, size = 0x3000, scoped, tag = 'input window, operand 1, single buffered']
    #allocation6 [shape = 's32[1]{0}', space=sflag, size = 0x4, scoped, tag = 'scoped memory for tpu_custom_call.1']
    #allocation7 [shape = 'u8[12288]{0}', space=vmem, size = 0x3000, scoped, tag = 'input window, operand 2, single buffered']
    #allocation8 [shape = 'u8[12288]{0}', space=vmem, size = 0x3000, scoped, tag = 'output window, operand 0, single buffered']
    %8 = vsyncpa [#allocation3], 0
    %9 = vsyncpa [#allocation6], 0
    %10 = vsyncpa [#allocation4], 0
    // Predicated region
    $region2: #{tpu_custom_call.1} parent=1 // pred_check
      _
    $region3: #{tpu_custom_call.1} parent=1 // pred_check_branch
      %12 = sbr.rel (0) target = $region5
    $region4: #{tpu_custom_call.1} parent=1 // pred_region
      %s14 = ssub.s32 384, 256
      %15 = vsyncadd [#allocation3], %s14
      %s16 = sshll.u32 [#allocation2], 4
      %s17 = int_to_ptr.vmem [resolvable:$true] %s16
      %22 = dma.hbm_to_vmem [thread:$0]  %s0, 256, %s17, [#allocation3], 128, 128, 8
    $region5: #{tpu_custom_call.1} parent=1 // pred_fallthru
      _
    // Predicated region
    $region6: #{tpu_custom_call.1} parent=1 // pred_check
      _
    $region7: #{tpu_custom_call.1} parent=1 // pred_check_branch
      %24 = sbr.rel (0) target = $region9
    $region8: #{tpu_custom_call.1} parent=1 // pred_region
      %s26 = ssub.s32 384, 384
      %27 = vsyncadd [#allocation6], %s26
      %s28 = sshll.u32 [#allocation5], 4
      %s29 = int_to_ptr.vmem [resolvable:$true] %s28
      %34 = dma.hbm_to_vmem [thread:$0]  %s1, 384, %s29, [#allocation6], 128, 128, 8
    $region9: #{tpu_custom_call.1} parent=1 // pred_fallthru
      _
    // Predicated region
    $region10: #{tpu_custom_call.1} parent=1 // pred_check
      _
    $region11: #{tpu_custom_call.1} parent=1 // pred_check_branch
      %36 = sbr.rel (0) target = $region13
    $region12: #{tpu_custom_call.1} parent=1 // pred_region
      %s38 = ssub.s32 384, 384
      %39 = vsyncadd [#allocation6], %s38
      %s40 = sshll.u32 [#allocation7], 4
      %s41 = int_to_ptr.vmem [resolvable:$true] %s40
      %46 = dma.hbm_to_vmem [thread:$0]  %s2, 384, %s41, [#allocation6], 128, 128, 8
    $region13: #{tpu_custom_call.1} parent=1 // pred_fallthru
      _
    // Predicated region
    $region14: #{tpu_custom_call.1} parent=1 // pred_check
      _
    $region15: #{tpu_custom_call.1} parent=1 // pred_check_branch
      %48 = sbr.rel (0) target = $region17
    $region16: #{tpu_custom_call.1} parent=1 // pred_region
      %49 = dma.done [#allocation3], 384
    $region17: #{tpu_custom_call.1} parent=1 // pred_fallthru
      _
    // Predicated region
    $region18: #{tpu_custom_call.1} parent=1 // pred_check
      _
    $region19: #{tpu_custom_call.1} parent=1 // pred_check_branch
      %51 = sbr.rel (0) target = $region21
    $region20: #{tpu_custom_call.1} parent=1 // pred_region
      %52 = dma.done [#allocation6], 384
    $region21: #{tpu_custom_call.1} parent=1 // pred_fallthru
      _
    // Predicated region
    $region22: #{tpu_custom_call.1} parent=1 // pred_check
      _
    $region23: #{tpu_custom_call.1} parent=1 // pred_check_branch
      %54 = sbr.rel (0) target = $region25
    $region24: #{tpu_custom_call.1} parent=1 // pred_region
      %55 = dma.done [#allocation6], 384
    $region25: #{tpu_custom_call.1} parent=1 // pred_fallthru
      _
    %v56 = vld [vmem:[#allocation2] sm:$0xff]
    %v57 = vld [vmem:[#allocation2 + $0x8] sm:$0xff]
    %v58 = vld [vmem:[#allocation2 + $0x10] sm:$0xff]
    %v59 = vld [vmem:[#allocation5] sm:$0xff]
    %v60 = vld [vmem:[#allocation5 + $0x8] sm:$0xff]
    %v61 = vld [vmem:[#allocation5 + $0x10] sm:$0xff]
    %v62 = vmul.f32 %v56, %v59
    %v63 = vmul.f32 %v57, %v60
    %v64 = vmul.f32 %v58, %v61
    %v65 = vld [vmem:[#allocation7] sm:$0xff]
    %v66 = vld [vmem:[#allocation7 + $0x8] sm:$0xff]
    %v67 = vld [vmem:[#allocation7 + $0x10] sm:$0xff]
    %v68 = vadd.f32 %v62, %v65
    %v69 = vadd.f32 %v63, %v66
    %v70 = vadd.f32 %v64, %v67
    %71 = vst [vmem:[#allocation8] sm:$0xff] %v68
    %72 = vst [vmem:[#allocation8 + $0x8] sm:$0xff] %v69
    %73 = vst [vmem:[#allocation8 + $0x10] sm:$0xff] %v70
    // Predicated region
    $region26: #{tpu_custom_call.1} parent=1 // pred_check
      _
    $region27: #{tpu_custom_call.1} parent=1 // pred_check_branch
      %75 = sbr.rel (0) target = $region29
    $region28: #{tpu_custom_call.1} parent=1 // pred_region
      %s77 = ssub.s32 384, 256
      %78 = vsyncadd [#allocation4], %s77
      %s79 = sshll.u32 [#allocation8], 4
      %s80 = int_to_ptr.vmem [resolvable:$true] %s79
      %85 = dma.vmem_to_hbm [thread:$0]  %s80, 256, %s3, [#allocation4], 128, 128, 8
    $region29: #{tpu_custom_call.1} parent=1 // pred_fallthru
      _
    // Predicated region
    $region30: #{tpu_custom_call.1} parent=1 // pred_check
      _
    $region31: #{tpu_custom_call.1} parent=1 // pred_check_branch
      %87 = sbr.rel (0) target = $region33
    $region32: #{tpu_custom_call.1} parent=1 // pred_region
      %88 = dma.done [#allocation4], 384
    $region33: #{tpu_custom_call.1} parent=1 // pred_fallthru
      _
    %89 = vsyncpa [#allocation3], 1
    %90 = vsyncpa [#allocation6], 1
    %91 = vsyncpa [#allocation4], 1

</llo_original>
